<compile_context>
chip_gen: v7x
topology: tpu7x:2x2x1
jax: 0.10.0
libtpu: 0.0.40
codegen_flags: <defaults>
</compile_context>

<pallas_src>
import numpy as np
import jax
import jax.numpy as jnp
from jax import lax
from jax.experimental import pallas as pl
from jax.experimental.pallas import tpu as pltpu

# -------- module hyperparameters (from __init__, deterministic) --------
IGNORE_INDEX = 0
ALPHA = 0.1
SMOOTH_TAIL = 0.01
NORMALIZE_LENGTH = True
V = 32                       # vocab size / number of classes
HEAD_CLS = (5, 7, 11)

TM_MAX = 8192                # row tile: 8192 x 32 f32 = 1 MiB logits per step


def make_cls_smooth(cls_num_list, alpha, smooth_tail):
    c = np.asarray(cls_num_list, dtype=np.float64)
    s = smooth_tail + (alpha - smooth_tail) * (c - c.min()) / (c.max() - c.min())
    return s.astype(np.float32)


def _round_up(x, m):
    return ((x + m - 1) // m) * m


def _row_tile(n):
    """Largest row tile <= TM_MAX (multiple of 8) such that the grid has >= 2
    steps whenever n allows it, so dimension_semantics=("parallel",) can shard
    the grid across both TensorCores on v7x (v5e/v6e: single TC, no harm)."""
    n8 = _round_up(max(n, 8), 8)
    half = _round_up((n8 + 1) // 2, 8)
    return max(8, min(TM_MAX, half))


# ======================================================================
# Pallas kernel 1: fused per-row stats over the vocab axis
#   col 0: argmax(logits)  (== argmax of softmax -> pred_index)
#   col 1: row max m
#   col 2: logsumexp residual  log(sum(exp(x - m)))
# One (TM, 8) f32 block per tile (single store stream; cols 3..7 unused).
# ======================================================================
def _stats_kernel(x_ref, s_ref):
    x = x_ref[...].astype(jnp.float32)                       # (TM, V)
    v = x.shape[-1]
    m = jnp.max(x, axis=-1, keepdims=True)                   # (TM, 1)
    col = lax.broadcasted_iota(jnp.int32, x.shape, 1)
    amax = jnp.min(jnp.where(x == m, col, v), axis=-1, keepdims=True)
    lse = jnp.log(jnp.sum(jnp.exp(x - m), axis=-1, keepdims=True))
    lane = lax.broadcasted_iota(jnp.int32, s_ref.shape, 1)   # (TM, 8)
    # col0 = argmax, col1 = m, cols 2..7 = lse (only col 2 is consumed later)
    s_ref[...] = jnp.where(lane == 0, amax.astype(jnp.float32),
                           jnp.where(lane == 1, m, lse))


def pallas_row_stats(x, tm):
    n, v = x.shape
    grid = pl.cdiv(n, tm)
    return pl.pallas_call(
        _stats_kernel,
        out_shape=jax.ShapeDtypeStruct((grid * tm, 8), jnp.float32),
        grid_spec=pltpu.PrefetchScalarGridSpec(
            num_scalar_prefetch=0, grid=(grid,),
            in_specs=[pl.BlockSpec((tm, v), lambda i: (i, 0))],
            out_specs=pl.BlockSpec((tm, 8), lambda i: (i, 0))),
        compiler_params=pltpu.CompilerParams(dimension_semantics=("parallel",)),
    )(x)


# ======================================================================
# Pallas kernel 2 (hot path): label-smoothed KL-divergence loss.
# All per-row scalars (target, max+lse, confidence, smoothing base, head flag)
# arrive pre-folded in the (TM, 8) side block; the only transcendental left is
# log(td).
# ======================================================================
def _kl_kernel(x_ref, side_ref, cls_ref, out_ref):
    x = x_ref[...].astype(jnp.float32)                       # (TM, V) logits
    side = side_ref[...]                                     # (TM, 8)
    cls_div = cls_ref[...]                                   # (1, V) cls_smooth/(V-1)

    tgt = side[:, 0:1].astype(jnp.int32)    # target class id
    mls = side[:, 1:2]                      # row max + logsumexp (from kernel 1)
    conf = side[:, 2:3]                     # confidence = 1 - sum(td) PRE-scatter
    base = side[:, 3:4]                     # per-row non-target td value (already /(V-1))
    head = side[:, 4:5]                     # 1.0 -> head-class row: add cls_div per column

    # log_softmax via the carried stats: a single subtract, no exp / reduce here.
    logp = x - mls

    col = lax.broadcasted_iota(jnp.int32, x.shape, 1)
    # true_dist: non-target columns = base (+ cls_div for head rows),
    # target column = confidence (scatter overwrite, matching torch order).
    td = jnp.where(col == tgt, conf, base + head * cls_div)

    # KLDivLoss(reduction='none'): td * (log(td) - logp), exactly 0 where
    # td == 0 (padding rows, marker / trailing one-hot zeros, OOB rows of the
    # ragged last tile).  This MUST stay a select: OOB rows read garbage
    # logits and a multiply-mask would let NaN*0 poison the partial sum.
    kl = jnp.where(td > 0.0,
                   td * (jnp.log(jnp.maximum(td, 1e-30)) - logp),
                   0.0)
    partial = jnp.sum(kl)

    # One lane/sublane-dense (8,128) partial-sum block per tile (value at
    # [0,0]); grid stays fully parallel, final sum is a trivial jnp.sum.
    r = lax.broadcasted_iota(jnp.int32, out_ref.shape, 0)
    c = lax.broadcasted_iota(jnp.int32, out_ref.shape, 1)
    out_ref[...] = jnp.where((r == 0) & (c == 0), partial, 0.0)


def pallas_kl_loss(x, side, cls_div, tm):
    n, v = x.shape
    grid = pl.cdiv(n, tm)
    parts = pl.pallas_call(
        _kl_kernel,
        out_shape=jax.ShapeDtypeStruct((grid * 8, 128), jnp.float32),
        grid_spec=pltpu.PrefetchScalarGridSpec(
            num_scalar_prefetch=0, grid=(grid,),
            in_specs=[pl.BlockSpec((tm, v), lambda i: (i, 0)),
                      pl.BlockSpec((tm, 8), lambda i: (i, 0)),
                      pl.BlockSpec((1, v), lambda i: (0, 0))],
            out_specs=pl.BlockSpec((8, 128), lambda i: (i, 0))),
        compiler_params=pltpu.CompilerParams(dimension_semantics=("parallel",)),
    )(x, side, cls_div)
    return jnp.sum(parts)


# -------- host-side glue (data-dependent scalar work only) --------
def _edit_distance(a, b):
    la, lb = len(a), len(b)
    dp = list(range(lb + 1))
    for i in range(1, la + 1):
        prev, dp[0] = dp[0], i
        for j in range(1, lb + 1):
            cur = dp[j]
            dp[j] = min(dp[j] + 1, dp[j - 1] + 1,
                        prev + (0 if a[i - 1] == b[j - 1] else 1))
            prev = cur
    return dp[lb]


def class_aware_labelsmoothing_v2(logits, target, cls_smooth, head_cls,
                                  alpha=ALPHA, padding_idx=IGNORE_INDEX,
                                  normalize_length=NORMALIZE_LENGTH):
    B, T, v = logits.shape
    x = logits.reshape(-1, v)                 # stays on device, native dtype
    n_all = x.shape[0]
    tm = _row_tile(n_all)
    grid = pl.cdiv(n_all, tm)
    n_pad = grid * tm

    # ---- Pallas kernel 1: per-row argmax / max / logsumexp (one pass) ----
    stats = pallas_row_stats(x, tm)
    mls = stats[:n_all, 1] + stats[:n_all, 2]       # stays on device

    # ---- host: per-segment edit distance (only small int arrays cross) ----
    pred_np = np.asarray(jax.device_get(stats[:n_all, 0])).astype(np.int64)
    t_np = np.asarray(jax.device_get(target)).reshape(-1).astype(np.int64)
    keep = np.nonzero(t_np != padding_idx)[0]
    t_f = t_np[keep]
    p_f = pred_np[keep]
    n_valid = int(keep.size)

    # TODO(synk): the per-segment Levenshtein distance (ed.eval) and the
    # data-dependent class-3 segment splitting are inherently sequential scalar
    # work with no clean Pallas equivalent; kept on host.  Only the tiny
    # per-segment smoothing scalars are shipped back to the device.
    seg_es = []
    i = 0
    for j in np.nonzero(t_f == 3)[0]:
        j = int(j)
        d = _edit_distance(t_f[i:j].tolist(), p_f[i:j].tolist())
        seg_es.append((1.0 - (1.0 - alpha) ** (1.0 / d)) if d != 0 else 1e-12)
        i = j + 1
    num_seg = len(seg_es)
    seg_es_dev = jnp.asarray(np.asarray(seg_es if num_seg else [0.0], np.float32))

    # ---- device: assemble the fused per-row side array with jnp ops ----
    tgt_dev = jnp.asarray(target).reshape(-1)
    valid = tgt_dev != padding_idx
    marker = valid & (tgt_dev == 3)
    m_i32 = marker.astype(jnp.int32)
    seg_id = jnp.cumsum(m_i32) - m_i32              # markers strictly before token
    in_seg = valid & (~marker) & (seg_id < num_seg)
    head_flag = jnp.zeros_like(valid)
    for h in head_cls:
        head_flag = head_flag | (tgt_dev == int(h))
    head_flag = head_flag & in_seg

    es_tok = jnp.where(
        in_seg, seg_es_dev[jnp.clip(seg_id, 0, max(num_seg - 1, 0))], 0.0)
    # smoothing/(V-1): head rows get es/(V-1) (+ cls_div per column in-kernel),
    # non-head rows get (es + 1e-12)/(V-1); rows outside segments stay 0.
    base = jnp.where(in_seg,
                     jnp.where(head_flag, es_tok, es_tok + 1e-12),
                     0.0) / (v - 1)

    cls_div_np = np.asarray(cls_smooth, np.float32) / (v - 1)
    sum_cls_div = float(cls_div_np.sum())
    # confidence = 1 - true_dist.sum(-1) computed PRE-scatter (the target
    # column's own smoothing is included), matching the torch scatter_ order.
    # Marker rows / rows after the last marker keep smoothing == 0 and hence
    # become pure one-hot rows (confidence 1, contribute -log p(target)),
    # exactly as in the reference.  Padding rows get confidence 0 so every
    # element of their true_dist is 0 and they drop out of the sum.
    sum_td = v * base + jnp.where(head_flag, sum_cls_div, 0.0)
    conf = jnp.where(valid, 1.0 - sum_td, 0.0)

    side_cols = jnp.stack([tgt_dev.astype(jnp.float32), mls, conf,
                           base.astype(jnp.float32),
                           head_flag.astype(jnp.float32)], axis=-1)
    side = jnp.zeros((n_pad, 8), jnp.float32).at[:n_all, :5].set(side_cols)

    cls_div_dev = jnp.asarray(cls_div_np.reshape(1, -1))

    # ---- Pallas kernel 2: the KL reduction over per-tile partial sums ----
    total = pallas_kl_loss(x, side, cls_div_dev, tm)
    denom = n_valid if normalize_length else B
    return total / denom


if __name__ == "__main__":
    key = jax.random.PRNGKey(0)
    B, T = 2, 8
    k1, k2 = jax.random.split(key, 2)
    logits = jax.random.normal(k1, (B, T, V), dtype=jnp.float32)
    target = jax.random.randint(k2, (B, T), 1, V, dtype=jnp.int32)

    # deterministically insert padding (ignore_index=0), segment markers
    # (class 3) and a head-class token so all code paths are exercised.
    target_np = np.asarray(jax.device_get(target)).copy()
    target_np[0, 0] = IGNORE_INDEX
    target_np[0, 4] = 3
    target_np[0, 7] = 3
    target_np[1, 2] = HEAD_CLS[0]
    target_np[1, 5] = 3
    target_np[1, 7] = IGNORE_INDEX
    target = jnp.asarray(target_np)

    # synthetic, deterministic class-frequency list (len == V)
    cls_num_list = (np.arange(1, V + 1, dtype=np.float64) * 10.0).tolist()
    cls_smooth = make_cls_smooth(cls_num_list, ALPHA, SMOOTH_TAIL)

    loss = class_aware_labelsmoothing_v2(logits, target, cls_smooth, HEAD_CLS)
    loss = jax.block_until_ready(loss)
    assert np.isfinite(float(loss))
    print("KERNEL_OK")
</pallas_src>

<mosaic_0001>
module attributes {stable_mosaic.version = 11 : i64} {
  func.func @_stats_kernel(%arg0: i32, %arg1: memref<8x32xf32, #tpu.memory_space<vmem>>, %arg2: memref<8x8xf32, #tpu.memory_space<vmem>>) attributes {dimension_semantics = [#tpu.dimension_semantics<parallel>], iteration_bounds = array<i64: 2>, scalar_prefetch = 0 : i64, scratch_operands = 0 : i64, tpu.core_type = #tpu.core_type<tc>, window_params = [{transform_indices = @transform_0, window_bounds = array<i64: 8, 32>}, {transform_indices = @transform_1, window_bounds = array<i64: 8, 8>}]} {
    %c0 = arith.constant 0 : index
    %c0_0 = arith.constant 0 : index
    %0 = vector.load %arg1[%c0, %c0_0] : memref<8x32xf32, #tpu.memory_space<vmem>>, vector<8x32xf32>
    %cst = arith.constant dense<0xFF800000> : vector<8xf32>
    %1 = vector.multi_reduction <maximumf>, %0, %cst [1] : vector<8x32xf32> to vector<8xf32>
    %2 = vector.shape_cast %1 : vector<8xf32> to vector<8x1xf32>
    %3 = tpu.iota {dimensions = array<i32: 1>} : vector<8x32xi32>
    %4 = vector.broadcast %2 : vector<8x1xf32> to vector<8x32xf32>
    %5 = arith.cmpf oeq, %0, %4 : vector<8x32xf32>
    %c32_i32 = arith.constant 32 : i32
    %6 = vector.broadcast %c32_i32 : i32 to vector<8x32xi32>
    %7 = arith.select %5, %3, %6 : vector<8x32xi1>, vector<8x32xi32>
    %cst_1 = arith.constant dense<2147483647> : vector<8xi32>
    %8 = vector.multi_reduction <minsi>, %7, %cst_1 [1] : vector<8x32xi32> to vector<8xi32>
    %9 = vector.shape_cast %8 : vector<8xi32> to vector<8x1xi32>
    %10 = vector.broadcast %2 : vector<8x1xf32> to vector<8x32xf32>
    %11 = arith.subf %0, %10 : vector<8x32xf32>
    %12 = math.exp %11 : vector<8x32xf32>
    %cst_2 = arith.constant dense<0.000000e+00> : vector<8xf32>
    %13 = vector.multi_reduction <add>, %12, %cst_2 [1] : vector<8x32xf32> to vector<8xf32>
    %14 = vector.shape_cast %13 : vector<8xf32> to vector<8x1xf32>
    %15 = math.log %14 : vector<8x1xf32>
    %16 = tpu.iota {dimensions = array<i32: 1>} : vector<8x8xi32>
    %c0_i32 = arith.constant 0 : i32
    %17 = vector.broadcast %c0_i32 : i32 to vector<8x8xi32>
    %18 = arith.cmpi eq, %16, %17 : vector<8x8xi32>
    %19 = arith.sitofp %9 : vector<8x1xi32> to vector<8x1xf32>
    %c1_i32 = arith.constant 1 : i32
    %20 = vector.broadcast %c1_i32 : i32 to vector<8x8xi32>
    %21 = arith.cmpi eq, %16, %20 : vector<8x8xi32>
    %22 = vector.shape_cast %2 : vector<8x1xf32> to vector<8x1xf32>
    %23 = vector.broadcast %22 : vector<8x1xf32> to vector<8x8xf32>
    %24 = vector.shape_cast %15 : vector<8x1xf32> to vector<8x1xf32>
    %25 = vector.broadcast %24 : vector<8x1xf32> to vector<8x8xf32>
    %26 = arith.select %21, %23, %25 : vector<8x8xi1>, vector<8x8xf32>
    %27 = vector.shape_cast %19 : vector<8x1xf32> to vector<8x1xf32>
    %28 = vector.broadcast %27 : vector<8x1xf32> to vector<8x8xf32>
    %29 = arith.select %18, %28, %26 : vector<8x8xi1>, vector<8x8xf32>
    %c0_3 = arith.constant 0 : index
    %c0_4 = arith.constant 0 : index
    %30 = vector.load %arg2[%c0_3, %c0_4] : memref<8x8xf32, #tpu.memory_space<vmem>>, vector<8x8xf32>
    tpu.vector_store %arg2[%c0_3, %c0_4], %29 {strides = array<i32>} : memref<8x8xf32, #tpu.memory_space<vmem>>, vector<8x8xf32>,
    return
  }
  func.func @transform_0(%arg0: i32) -> (i32, i32) {
    %c0_i32 = arith.constant 0 : i32
    %c0_i32_0 = arith.constant 0 : i32
    return %arg0, %c0_i32 : i32, i32
  }
  func.func @transform_1(%arg0: i32) -> (i32, i32) {
    %c0_i32 = arith.constant 0 : i32
    %c0_i32_0 = arith.constant 0 : i32
    return %arg0, %c0_i32 : i32, i32
  }
}

</mosaic_0001>

<llo_original>
// kernel: tpu_custom_call.1
$region0: #{tpu_custom_call.1}
  #allocation0 [shape = 'u32[]', space=smem, size = 0x4, offset = 0x4, fixed_abs, tag = 'smem constant byte address 0x4 - core index']
  #allocation1 [shape = 'u32[144,128]{1,0:T(1,128)}', space=vmem, size = 0x12000, scoped, tag = 'internal scratch']
  %s0 = inlined_call_operand.hbm [shape: f32[16,32], index: 0, kind: input, shape index: {}]
  %s1 = inlined_call_operand.vmem [shape: f32[16,8], index: 1, kind: output, shape index: {}]
  %s2 = sld [smem:[#allocation0]]
  $region41: #{tpu_custom_call.1} parent=0
    _
  %s4 = ssub.s32 1, %s2
  %s5 = scalar_select 0, %s4, %s2
  $region1: #{tpu_custom_call.1} parent=0
    #allocation2 [shape = 'u8[8192]{0}', space=vmem, size = 0x2000, scoped, tag = 'input window, operand 0']
    #allocation3 [shape = 's32[2]{0}', space=sflag, size = 0x8, scoped, tag = 'scoped memory for tpu_custom_call.1']
    %6 = vsyncpa [#allocation3], 0
    %s7 = scalar_lea.sflag [#allocation3], 1
    %8 = vsyncpa %s7, 0
    loop: start=0, step=1, limit=4
    $region2: #{tpu_custom_call.1} parent=1 // loop_pre_header
      _
    $region3: #{tpu_custom_call.1} parent=1 // loop_header
      %s10 = sphi 0, %s14
      %p11 = scmp.ge.s32.totalorder %s10, 4
      %s20 = sphi 0, %s22
      %s23 = sphi 0, %s20
      %s24 = sphi 0, %s23
      %s40 = sphi 0, %s24
      %s46 = sphi 0, %s48
      %s49 = sphi 0, %s46
      %s50 = sphi 0, %s49
      %s66 = sphi 0, %s50
    $region4: #{tpu_custom_call.1} parent=1 // loop_header_branch
      %13 = sbr.rel (%p11) target = $region8
    $region5: #{tpu_custom_call.1} parent=1 // loop_body
      %s15 = ssub.s32 %s10, 1
      %s16 = ssub.s32 %s10, 2
      %s17 = sadd.s32 %s10, 1
      %s18 = ssub.s32 %s10, %s17
      %p19 = scmp.eq.s32.totalorder %s18, 0
      %s21 = sadd.s32 %s20, 1
      %s22 = scalar_select %p19, %s20, %s21
      %p25 = pneg %p19
      %p26 = scmp.eq.s32.totalorder %s10, 1
      %p27 = por %p25, %p26
      %p28 = scmp.ne.s32.totalorder %s20, %s23
      %p29 = scmp.eq.s32.totalorder %s10, 0
      %p30 = por %p28, %p29
      %p31 = scmp.ne.s32.totalorder %s20, %s23
      %p32 = scmp.eq.s32.totalorder %s15, 1
      %p33 = por %p31, %p32
      %p34 = scmp.ne.s32.totalorder %s23, %s24
      %p35 = scmp.eq.s32.totalorder %s15, 0
      %p36 = por %p34, %p35
      %p37 = scmp.ne.s32.totalorder %s23, %s24
      %p38 = scmp.eq.s32.totalorder %s16, 1
      %p39 = por %p37, %p38
      %p41 = scmp.ne.s32.totalorder %s24, %s40
      %p42 = scmp.eq.s32.totalorder %s16, 0
      %p43 = por %p41, %p42
      %s44 = ssub.s32 %s10, %s17
      %p45 = scmp.eq.s32.totalorder %s44, 0
      %s47 = sadd.s32 %s46, 1
      %s48 = scalar_select %p45, %s46, %s47
      %p51 = pneg %p45
      %p52 = scmp.eq.s32.totalorder %s10, 1
      %p53 = por %p51, %p52
      %p54 = scmp.ne.s32.totalorder %s46, %s49
      %p55 = scmp.eq.s32.totalorder %s10, 0
      %p56 = por %p54, %p55
      %p57 = scmp.ne.s32.totalorder %s46, %s49
      %p58 = scmp.eq.s32.totalorder %s15, 1
      %p59 = por %p57, %p58
      %p60 = scmp.ne.s32.totalorder %s49, %s50
      %p61 = scmp.eq.s32.totalorder %s15, 0
      %p62 = por %p60, %p61
      %p63 = scmp.ne.s32.totalorder %s49, %s50
      %p64 = scmp.eq.s32.totalorder %s16, 1
      %p65 = por %p63, %p64
      %p67 = scmp.ne.s32.totalorder %s50, %s66
      %p68 = scmp.eq.s32.totalorder %s16, 0
      %p69 = por %p67, %p68
      %p70 = scmp.le.s32.totalorder 1, %s10
      %p71 = scmp.lt.s32.totalorder %s10, 3
      %p72 = pnand %p70, %p71
      %p73 = pneg %p72
      // Predicated region
      $region9: #{tpu_custom_call.1} parent=5 // pred_check
        _
      $region10: #{tpu_custom_call.1} parent=5 // pred_check_branch
        %75 = sbr.rel (%p72) target = $region12
      $region11: #{tpu_custom_call.1} parent=5 // pred_region
        %s76 = ssub.s32 %s10, 1
      $region12: #{tpu_custom_call.1} parent=5 // pred_fallthru
        _
      %p77 = scmp.lt.s32.totalorder %s10, 2
      // Predicated region
      $region13: #{tpu_custom_call.1} parent=5 // pred_check
        %p78 = pneg %p77
      $region14: #{tpu_custom_call.1} parent=5 // pred_check_branch
        %80 = sbr.rel (%p78) target = $region16
      $region15: #{tpu_custom_call.1} parent=5 // pred_region
        // Predicated region
        $region17: #{tpu_custom_call.1} parent=15 // pred_check
          %p81 = pneg %p30
        $region18: #{tpu_custom_call.1} parent=15 // pred_check_branch
          %83 = sbr.rel (%p81) target = $region20
        $region19: #{tpu_custom_call.1} parent=15 // pred_region
          %s84 = sand.u32 %s20, 1
          %s85 = scalar_lea.sflag [#allocation3], %s84
          %s86 = sand.u32 %s20, 1
          %s87 = smul.addr %s86, 8
          %s88 = scalar_lea.vmem [#allocation2], %s87
          %s90 = ssub.s32 128, 128
          %91 = vsyncadd %s85, %s90
          %s92 = smul.addr %s10, 128
          %s93 = scalar_lea.hbm %s0, %s92
          %s95 = sshll.u32 %s88, 4
          %s96 = int_to_ptr.vmem [resolvable:$true] %s95
          %98 = dma.hbm_to_vmem [thread:$0]  %s93, 128, %s96, %s85
        $region20: #{tpu_custom_call.1} parent=15 // pred_fallthru
          _
      $region16: #{tpu_custom_call.1} parent=5 // pred_fallthru
        _
      %p99 = scmp.le.s32.totalorder 1, %s10
      %p100 = scmp.lt.s32.totalorder %s10, 3
      %p101 = pnand %p99, %p100
      %p102 = pneg %p101
      // Predicated region
      $region21: #{tpu_custom_call.1} parent=5 // pred_check
        _
      $region22: #{tpu_custom_call.1} parent=5 // pred_check_branch
        %104 = sbr.rel (%p101) target = $region24
      $region23: #{tpu_custom_call.1} parent=5 // pred_region
        %s105 = ssub.s32 %s10, 1
        %s106 = sand.u32 %s23, 1
        %s107 = scalar_lea.sflag [#allocation3], %s106
        %s108 = sand.u32 %s23, 1
        %s109 = smul.addr %s108, 8
        %s110 = scalar_lea.vmem [#allocation2], %s109
        // Predicated region
        $region25: #{tpu_custom_call.1} parent=23 // pred_check
          %p111 = pneg %p36
        $region26: #{tpu_custom_call.1} parent=23 // pred_check_branch
          %113 = sbr.rel (%p111) target = $region28
        $region27: #{tpu_custom_call.1} parent=23 // pred_region
          %114 = dma.done %s107, 128
        $region28: #{tpu_custom_call.1} parent=23 // pred_fallthru
          _
        %s115 = sand.u32 %s23, 1
        %s116 = scalar_lea.sflag [#allocation3], %s115
        %s117 = sand.u32 %s23, 1
        %s118 = smul.addr %s117, 8
        %s119 = scalar_lea.vmem [#allocation2], %s118
        %p120 = pneg %p36
        %p121 = pneg %p33
        %p122 = pneg %p62
        %p123 = pneg %p59
        %p124 = scmp.lt.s32.totalorder %s15, 1
        %s125 = scalar_select %p124, %s15, 1
        %s126 = smul.addr %s125, 8
        %s127 = scalar_lea.vmem %s1, %s126
        %p128 = scmp.lt.s32.totalorder %s15, 1
        %s129 = scalar_select %p128, %s15, 1
        %s130 = smul.addr %s129, 8
        %s131 = scalar_lea.vmem %s1, %s130
        %v132 = vld [vmem:[%s110] sm:$0xff]
        %vm133 = vcmask 261120
        %v134 = vsel %vm133, %v132, -inf
        %135 = vmax.xlane.f32.xlu0 %v134
        %v136 = vpop.xlane.xlu0 %135
        %v137 = vlaneseq
        %v138 = vand.u32 %v137, 127
        %vm139 = vcmp.eq.f32.partialorder %v132, %v136
        %v140 = vsel %vm139, %v138, 32
        %v141 = vsel %vm133, %v140, 2147483647
        %v142 = vand.u32 %v141, 65535
        %v143 = vshra.s32 %v141, 16
        %v144 = vcvt.s32.f32 %v142
        %v145 = vcvt.s32.f32 %v143
        %146 = vmin.xlane.f32.xlu0 %v145
        %v147 = vpop.xlane.xlu0 %146
        %vm148 = vcmp.eq.f32.partialorder %v145, %v147
        %v149 = vsel %vm148, %v144, inf
        %150 = vmin.xlane.f32.xlu0 %v149
        %v151 = vpop.xlane.xlu0 %150
        %v152 = vcvt.f32.s32 %v151
        %v153 = vcvt.f32.s32 %v147
        %v154 = vshll.u32 %v153, 16
        %v155 = vadd.s32 %v154, %v152
        %v156 = vsub.f32 %v132, %v136
        %v157 = vmul.f32 %v156, 1.442695
        %v158 = vpow.pop %v157
        %v159 = vsel %vm133, %v158, 0.0
        %160 = vadd.xlane.f32.xlu0 %v159
        %v161 = vpop.xlane.xlu0 %160
        %v162 = vlog2.pop %v161
        %v163 = vmul.f32 %v162, 0.6931472
        %vm164 = vcmp.eq.s32.totalorder %v138, 0
        %v165 = vcvt.s32.f32 %v155
        %vm166 = vcmp.eq.s32.totalorder %v138, 1
        %v167 = vsel %vm166, %v136, %v163
        %v168 = vsel %vm164, %v165, %v167
        %vm169 = vcmask 64512
        %170 = vst.msk [vmem:[%s131] sm:$0xff] %vm169, %v168
        %p171 = scmp.lt.s32.totalorder %s15, 1
        %s172 = scalar_select %p171, %s15, 1
        %s173 = smul.addr %s172, 8
        %s174 = scalar_lea.vmem %s1, %s173
        // Predicated region
        $region29: #{tpu_custom_call.1} parent=23 // pred_check
          %p175 = pneg %p59
        $region30: #{tpu_custom_call.1} parent=23 // pred_check_branch
          %177 = sbr.rel (%p175) target = $region32
        $region31: #{tpu_custom_call.1} parent=23 // pred_region
          _
        $region32: #{tpu_custom_call.1} parent=23 // pred_fallthru
          _
      $region24: #{tpu_custom_call.1} parent=5 // pred_fallthru
        _
      %p178 = scmp.le.s32.totalorder 2, %s10
      // Predicated region
      $region33: #{tpu_custom_call.1} parent=5 // pred_check
        %p179 = pneg %p178
      $region34: #{tpu_custom_call.1} parent=5 // pred_check_branch
        %181 = sbr.rel (%p179) target = $region36
      $region35: #{tpu_custom_call.1} parent=5 // pred_region
        %s182 = ssub.s32 %s10, 2
        // Predicated region
        $region37: #{tpu_custom_call.1} parent=35 // pred_check
          %p183 = pneg %p65
        $region38: #{tpu_custom_call.1} parent=35 // pred_check_branch
          %185 = sbr.rel (%p183) target = $region40
        $region39: #{tpu_custom_call.1} parent=35 // pred_region
          %p186 = scmp.lt.s32.totalorder %s16, 1
          %s187 = scalar_select %p186, %s16, 1
          %s188 = smul.addr %s187, 8
          %s189 = scalar_lea.vmem %s1, %s188
        $region40: #{tpu_custom_call.1} parent=35 // pred_fallthru
          _
      $region36: #{tpu_custom_call.1} parent=5 // pred_fallthru
        _
    $region6: #{tpu_custom_call.1} parent=1 // loop_footer
      %s14 = sadd.s32 1, %s10
    $region7: #{tpu_custom_call.1} parent=1 // loop_footer_branch
      %9 = sbr.rel target = $region3
    $region8: #{tpu_custom_call.1} parent=1 // loop_exit
      _
    %190 = vsyncpa [#allocation3], 1
    %s191 = scalar_lea.sflag [#allocation3], 1
    %192 = vsyncpa %s191, 1

</llo_original>
